<compile_context>
chip_gen: v6e
topology: v6e:2x2x1
jax: 0.10.0
libtpu: 0.0.40
codegen_flags: <defaults>
</compile_context>

<pallas_src>
import jax
import jax.numpy as jnp
from jax.experimental import pallas as pl
from jax.experimental.pallas import tpu as pltpu

IN_FEATURES = 28 * 28      # 784
OUT_FEATURES = 10
PADDED_OUT = 128           # lane-dense output width
TB_MAX = 1024              # batch tile: 1024x784 bf16 ~ 1.5 MiB/buffer, x2 for
                           # double buffering — fits default scoped VMEM on
                           # v5e/v6e/v7x with plenty of headroom.


def linear_kernel(x_ref, w_ref, b_ref, o_ref):
    # x_ref: (TB, 784) bf16   w_ref: (784, 128) bf16
    # b_ref: (1, 128)  f32    o_ref: (TB, 128)  f32
    acc = jnp.dot(x_ref[...], w_ref[...], preferred_element_type=jnp.float32)
    o_ref[...] = acc + b_ref[...]


def net_forward(x_nchw, weight, bias):
    """Forward pass of Net.

    x_nchw: (B, 1, 28, 28) float32
    weight: (10, 784) float32  (torch nn.Linear layout)
    bias:   (10,)     float32
    returns (B, 10) float32
    """
    B = x_nchw.shape[0]
    # == torch x.view(-1, 28*28); cast activations to bf16 (f32 accumulate in kernel).
    x = x_nchw.reshape(B, IN_FEATURES).astype(jnp.bfloat16)

    # Pre-transpose and zero-pad the weight to (784, 128) so the kernel computes
    # x @ W_t + b with a lane-dense output tile; bias padded to (1, 128), kept f32.
    w_t = jnp.zeros((IN_FEATURES, PADDED_OUT), jnp.bfloat16)
    w_t = w_t.at[:, :OUT_FEATURES].set(weight.T.astype(jnp.bfloat16))
    b_pad = jnp.zeros((1, PADDED_OUT), jnp.float32)
    b_pad = b_pad.at[:, :OUT_FEATURES].set(bias.astype(jnp.float32))

    # Batch tile: a single full-B tile for small batches (block == full dim is
    # always legal), TB_MAX rows otherwise (multiple of 8, ragged tail masked).
    tb = B if B <= TB_MAX else TB_MAX
    grid = (pl.cdiv(B, tb),)

    out_padded = pl.pallas_call(
        linear_kernel,
        out_shape=jax.ShapeDtypeStruct((B, PADDED_OUT), jnp.float32),
        grid=grid,
        in_specs=[
            pl.BlockSpec((tb, IN_FEATURES), lambda i: (i, 0)),
            pl.BlockSpec((IN_FEATURES, PADDED_OUT), lambda i: (0, 0)),  # weight resident
            pl.BlockSpec((1, PADDED_OUT), lambda i: (0, 0)),            # bias resident
        ],
        out_specs=pl.BlockSpec((tb, PADDED_OUT), lambda i: (i, 0)),
        compiler_params=pltpu.CompilerParams(
            dimension_semantics=("parallel",)),   # megacore-shardable on v7x
    )(x, w_t, b_pad)

    return out_padded[:, :OUT_FEATURES]


if __name__ == "__main__":
    key = jax.random.PRNGKey(0)
    kx, kw, kb = jax.random.split(key, 3)

    B = 2
    x = jax.random.normal(kx, (B, 1, 28, 28), dtype=jnp.float32)

    # Deterministic parameter init (matches nn.Linear shapes: weight (10, 784),
    # bias (10,)).
    bound = 1.0 / (IN_FEATURES ** 0.5)
    weight = jax.random.uniform(kw, (OUT_FEATURES, IN_FEATURES),
                                minval=-bound, maxval=bound, dtype=jnp.float32)
    bias = jax.random.uniform(kb, (OUT_FEATURES,),
                              minval=-bound, maxval=bound, dtype=jnp.float32)

    out = net_forward(x, weight, bias)
    jax.block_until_ready(out)
    assert out.shape == (B, OUT_FEATURES)

    # Reference with the same bf16 inputs / f32 accumulation (tight tolerance).
    x_flat_bf16 = x.reshape(B, IN_FEATURES).astype(jnp.bfloat16)
    ref_bf16 = jnp.dot(x_flat_bf16, weight.T.astype(jnp.bfloat16),
                       preferred_element_type=jnp.float32) + bias
    assert jnp.allclose(out, ref_bf16, atol=1e-3, rtol=1e-3)

    # Sanity check against the pure-f32 torch-equivalent reference (loose
    # tolerance for the bf16 activation/weight cast).
    ref_f32 = x.reshape(B, IN_FEATURES) @ weight.T + bias
    assert jnp.allclose(out, ref_f32, atol=5e-2, rtol=5e-2)

    print("KERNEL_OK")
</pallas_src>

<mosaic_0001>
module attributes {stable_mosaic.version = 11 : i64} {
  func.func @linear_kernel(%arg0: i32, %arg1: memref<2x784xbf16, #tpu.memory_space<vmem>>, %arg2: memref<784x128xbf16, #tpu.memory_space<vmem>>, %arg3: memref<1x128xf32, #tpu.memory_space<vmem>>, %arg4: memref<2x128xf32, #tpu.memory_space<vmem>>) attributes {dimension_semantics = [#tpu.dimension_semantics<parallel>], iteration_bounds = array<i64: 1>, scalar_prefetch = 0 : i64, scratch_operands = 0 : i64, tpu.core_type = #tpu.core_type<tc>, window_params = [{transform_indices = @transform_0, window_bounds = array<i64: 2, 784>}, {pipeline_mode = #tpu.pipeline_mode<synchronous>, transform_indices = @transform_1, window_bounds = array<i64: 784, 128>}, {pipeline_mode = #tpu.pipeline_mode<synchronous>, transform_indices = @transform_2, window_bounds = array<i64: 1, 128>}, {transform_indices = @transform_3, window_bounds = array<i64: 2, 128>}]} {
    %c0 = arith.constant 0 : index
    %c0_0 = arith.constant 0 : index
    %0 = vector.load %arg1[%c0, %c0_0] : memref<2x784xbf16, #tpu.memory_space<vmem>>, vector<2x784xbf16>
    %c0_1 = arith.constant 0 : index
    %c0_2 = arith.constant 0 : index
    %1 = vector.load %arg2[%c0_1, %c0_2] : memref<784x128xbf16, #tpu.memory_space<vmem>>, vector<784x128xbf16>
    %cst = arith.constant dense<0.000000e+00> : vector<2x128xf32>
    %2 = tpu.matmul %0, %1, %cst {dimension_numbers = #tpu.dot_dimension_numbers<[1], [0], [0], [1], [0, 0, 1, 1], [], []>} : vector<2x784xbf16>, vector<784x128xbf16>, vector<2x128xf32> -> vector<2x128xf32>
    %c0_3 = arith.constant 0 : index
    %c0_4 = arith.constant 0 : index
    %3 = vector.load %arg3[%c0_3, %c0_4] : memref<1x128xf32, #tpu.memory_space<vmem>>, vector<1x128xf32>
    %4 = vector.broadcast %3 : vector<1x128xf32> to vector<2x128xf32>
    %5 = arith.addf %2, %4 : vector<2x128xf32>
    %c0_5 = arith.constant 0 : index
    %c0_6 = arith.constant 0 : index
    %6 = vector.load %arg4[%c0_5, %c0_6] : memref<2x128xf32, #tpu.memory_space<vmem>>, vector<2x128xf32>
    tpu.vector_store %arg4[%c0_5, %c0_6], %5 {strides = array<i32>} : memref<2x128xf32, #tpu.memory_space<vmem>>, vector<2x128xf32>,
    return
  }
  func.func @transform_0(%arg0: i32) -> (i32, i32) {
    %c0_i32 = arith.constant 0 : i32
    %c0_i32_0 = arith.constant 0 : i32
    return %arg0, %c0_i32 : i32, i32
  }
  func.func @transform_1(%arg0: i32) -> (i32, i32) {
    %c0_i32 = arith.constant 0 : i32
    %c0_i32_0 = arith.constant 0 : i32
    %c0_i32_1 = arith.constant 0 : i32
    return %c0_i32, %c0_i32_0 : i32, i32
  }
  func.func @transform_2(%arg0: i32) -> (i32, i32) {
    %c0_i32 = arith.constant 0 : i32
    %c0_i32_0 = arith.constant 0 : i32
    %c0_i32_1 = arith.constant 0 : i32
    return %c0_i32, %c0_i32_0 : i32, i32
  }
  func.func @transform_3(%arg0: i32) -> (i32, i32) {
    %c0_i32 = arith.constant 0 : i32
    %c0_i32_0 = arith.constant 0 : i32
    return %arg0, %c0_i32 : i32, i32
  }
}

</mosaic_0001>

<llo_original>
// kernel: tpu_custom_call.1
$region0: #{tpu_custom_call.1}
  #allocation0 [shape = 'u32[]', space=smem, size = 0x4, offset = 0x4, fixed_abs, tag = 'smem constant byte address 0x4 - core index']
  #allocation1 [shape = 'u32[144,128]{1,0:T(1,128)}', space=vmem, size = 0x12000, scoped, tag = 'internal scratch']
  %s0 = inlined_call_operand.hbm [shape: bf16[2,784], index: 0, kind: input, shape index: {}]
  %s1 = inlined_call_operand.hbm [shape: bf16[784,128], index: 1, kind: input, shape index: {}]
  %s2 = inlined_call_operand.vmem [shape: f32[1,128], index: 2, kind: input, shape index: {}]
  %s3 = inlined_call_operand.hbm [shape: f32[2,128], index: 3, kind: output, shape index: {}]
  %s4 = sld [smem:[#allocation0]]
  $region30: #{tpu_custom_call.1} parent=0
    _
  %s6 = ssub.s32 1, %s4
  %s7 = scalar_select 0, %s6, %s4
  $region1: #{tpu_custom_call.1} parent=0
    #allocation2 [shape = 'u8[3584]{0}', space=vmem, size = 0x1000, scoped, tag = 'input window, operand 0, single buffered']
    #allocation3 [shape = 's32[1]{0}', space=sflag, size = 0x4, scoped, tag = 'scoped memory for tpu_custom_call.1']
    #allocation4 [shape = 's32[1]{0}', space=sflag, size = 0x4, scoped, tag = 'scoped memory for tpu_custom_call.1']
    #allocation5 [shape = 'u8[200704]{0}', space=vmem, size = 0x31000, scoped, tag = 'input window, operand 1, single buffered']
    #allocation6 [shape = 's32[1]{0}', space=sflag, size = 0x4, scoped, tag = 'scoped memory for tpu_custom_call.1']
    #allocation7 [shape = 'u8[1024]{0}', space=vmem, size = 0x400, scoped, tag = 'output window, operand 0, single buffered']
    %8 = vsyncpa [#allocation3], 0
    %9 = vsyncpa [#allocation6], 0
    %10 = vsyncpa [#allocation4], 0
    // Predicated region
    $region2: #{tpu_custom_call.1} parent=1 // pred_check
      _
    $region3: #{tpu_custom_call.1} parent=1 // pred_check_branch
      %12 = sbr.rel (0) target = $region5
    $region4: #{tpu_custom_call.1} parent=1 // pred_region
      %s14 = ssub.s32 112, 112
      %15 = vsyncadd [#allocation3], %s14
      %s17 = sshll.u32 [#allocation2], 4
      %s18 = int_to_ptr.vmem [resolvable:$true] %s17
      %20 = dma.hbm_to_vmem [thread:$0]  %s0, 112, %s18, [#allocation3]
    $region5: #{tpu_custom_call.1} parent=1 // pred_fallthru
      _
    // Predicated region
    $region6: #{tpu_custom_call.1} parent=1 // pred_check
      _
    $region7: #{tpu_custom_call.1} parent=1 // pred_check_branch
      %22 = sbr.rel (0) target = $region9
    $region8: #{tpu_custom_call.1} parent=1 // pred_region
      %s24 = ssub.s32 6272, 6272
      %25 = vsyncadd [#allocation6], %s24
      %s26 = sshll.u32 [#allocation5], 4
      %s27 = int_to_ptr.vmem [resolvable:$true] %s26
      %32 = dma.hbm_to_vmem [thread:$0]  %s1, 6272, %s27, [#allocation6], 64, 64, 4
    $region9: #{tpu_custom_call.1} parent=1 // pred_fallthru
      _
    // Predicated region
    $region10: #{tpu_custom_call.1} parent=1 // pred_check
      _
    $region11: #{tpu_custom_call.1} parent=1 // pred_check_branch
      %34 = sbr.rel (0) target = $region13
    $region12: #{tpu_custom_call.1} parent=1 // pred_region
      _
    $region13: #{tpu_custom_call.1} parent=1 // pred_fallthru
      _
    // Predicated region
    $region14: #{tpu_custom_call.1} parent=1 // pred_check
      _
    $region15: #{tpu_custom_call.1} parent=1 // pred_check_branch
      %36 = sbr.rel (0) target = $region17
    $region16: #{tpu_custom_call.1} parent=1 // pred_region
      %37 = dma.done [#allocation3], 112
    $region17: #{tpu_custom_call.1} parent=1 // pred_fallthru
      _
    // Predicated region
    $region18: #{tpu_custom_call.1} parent=1 // pred_check
      _
    $region19: #{tpu_custom_call.1} parent=1 // pred_check_branch
      %39 = sbr.rel (0) target = $region21
    $region20: #{tpu_custom_call.1} parent=1 // pred_region
      %40 = dma.done [#allocation6], 6272
    $region21: #{tpu_custom_call.1} parent=1 // pred_fallthru
      _
    %v42 = vld [vmem:[#allocation2] sm:$0x7f]
    %v43 = vld [vmem:[#allocation5] sm:$0xf]
    %v44 = vld [vmem:[#allocation5 + $0x4] sm:$0xf]
    %v45 = vld [vmem:[#allocation5 + $0x8] sm:$0xf]
    %v46 = vld [vmem:[#allocation5 + $0xc] sm:$0xf]
    %v47 = vld [vmem:[#allocation5 + $0x10] sm:$0xf]
    %v48 = vld [vmem:[#allocation5 + $0x14] sm:$0xf]
    %v49 = vld [vmem:[#allocation5 + $0x18] sm:$0xf]
    %v50 = vld [vmem:[#allocation5 + $0x1c] sm:$0xf]
    %v51 = vld [vmem:[#allocation5 + $0x20] sm:$0xf]
    %v52 = vld [vmem:[#allocation5 + $0x24] sm:$0xf]
    %v53 = vld [vmem:[#allocation5 + $0x28] sm:$0xf]
    %v54 = vld [vmem:[#allocation5 + $0x2c] sm:$0xf]
    %v55 = vld [vmem:[#allocation5 + $0x30] sm:$0xf]
    %v56 = vld [vmem:[#allocation5 + $0x34] sm:$0xf]
    %v57 = vld [vmem:[#allocation5 + $0x38] sm:$0xf]
    %v58 = vld [vmem:[#allocation5 + $0x3c] sm:$0xf]
    %v59 = vld [vmem:[#allocation5 + $0x40] sm:$0xf]
    %v60 = vld [vmem:[#allocation5 + $0x44] sm:$0xf]
    %v61 = vld [vmem:[#allocation5 + $0x48] sm:$0xf]
    %v62 = vld [vmem:[#allocation5 + $0x4c] sm:$0xf]
    %v63 = vld [vmem:[#allocation5 + $0x50] sm:$0xf]
    %v64 = vld [vmem:[#allocation5 + $0x54] sm:$0xf]
    %v65 = vld [vmem:[#allocation5 + $0x58] sm:$0xf]
    %v66 = vld [vmem:[#allocation5 + $0x5c] sm:$0xf]
    %v67 = vld [vmem:[#allocation5 + $0x60] sm:$0xf]
    %v68 = vld [vmem:[#allocation5 + $0x64] sm:$0xf]
    %v69 = vld [vmem:[#allocation5 + $0x68] sm:$0xf]
    %v70 = vld [vmem:[#allocation5 + $0x6c] sm:$0xf]
    %v71 = vld [vmem:[#allocation5 + $0x70] sm:$0xf]
    %v72 = vld [vmem:[#allocation5 + $0x74] sm:$0xf]
    %v73 = vld [vmem:[#allocation5 + $0x78] sm:$0xf]
    %v74 = vld [vmem:[#allocation5 + $0x7c] sm:$0xf]
    %v75 = vld [vmem:[#allocation5 + $0x80] sm:$0xf]
    %v76 = vld [vmem:[#allocation5 + $0x84] sm:$0xf]
    %v77 = vld [vmem:[#allocation5 + $0x88] sm:$0xf]
    %v78 = vld [vmem:[#allocation5 + $0x8c] sm:$0xf]
    %v79 = vld [vmem:[#allocation5 + $0x90] sm:$0xf]
    %v80 = vld [vmem:[#allocation5 + $0x94] sm:$0xf]
    %v81 = vld [vmem:[#allocation5 + $0x98] sm:$0xf]
    %v82 = vld [vmem:[#allocation5 + $0x9c] sm:$0xf]
    %v83 = vld [vmem:[#allocation5 + $0xa0] sm:$0xf]
    %v84 = vld [vmem:[#allocation5 + $0xa4] sm:$0xf]
    %v85 = vld [vmem:[#allocation5 + $0xa8] sm:$0xf]
    %v86 = vld [vmem:[#allocation5 + $0xac] sm:$0xf]
    %v87 = vld [vmem:[#allocation5 + $0xb0] sm:$0xf]
    %v88 = vld [vmem:[#allocation5 + $0xb4] sm:$0xf]
    %v89 = vld [vmem:[#allocation5 + $0xb8] sm:$0xf]
    %v90 = vld [vmem:[#allocation5 + $0xbc] sm:$0xf]
    %v91 = vld [vmem:[#allocation5 + $0xc0] sm:$0xf]
    %v92 = vld [vmem:[#allocation5 + $0xc4] sm:$0xf]
    %v93 = vld [vmem:[#allocation5 + $0xc8] sm:$0xf]
    %v94 = vld [vmem:[#allocation5 + $0xcc] sm:$0xf]
    %v95 = vld [vmem:[#allocation5 + $0xd0] sm:$0xf]
    %v96 = vld [vmem:[#allocation5 + $0xd4] sm:$0xf]
    %v97 = vld [vmem:[#allocation5 + $0xd8] sm:$0xf]
    %v98 = vld [vmem:[#allocation5 + $0xdc] sm:$0xf]
    %v99 = vld [vmem:[#allocation5 + $0xe0] sm:$0xf]
    %v100 = vld [vmem:[#allocation5 + $0xe4] sm:$0xf]
    %v101 = vld [vmem:[#allocation5 + $0xe8] sm:$0xf]
    %v102 = vld [vmem:[#allocation5 + $0xec] sm:$0xf]
    %v103 = vld [vmem:[#allocation5 + $0xf0] sm:$0xf]
    %v104 = vld [vmem:[#allocation5 + $0xf4] sm:$0xf]
    %v105 = vld [vmem:[#allocation5 + $0xf8] sm:$0xf]
    %v106 = vld [vmem:[#allocation5 + $0xfc] sm:$0xf]
    %v107 = vld [vmem:[#allocation5 + $0x100] sm:$0xf]
    %v108 = vld [vmem:[#allocation5 + $0x104] sm:$0xf]
    %v109 = vld [vmem:[#allocation5 + $0x108] sm:$0xf]
    %v110 = vld [vmem:[#allocation5 + $0x10c] sm:$0xf]
    %v111 = vld [vmem:[#allocation5 + $0x110] sm:$0xf]
    %v112 = vld [vmem:[#allocation5 + $0x114] sm:$0xf]
    %v113 = vld [vmem:[#allocation5 + $0x118] sm:$0xf]
    %v114 = vld [vmem:[#allocation5 + $0x11c] sm:$0xf]
    %v115 = vld [vmem:[#allocation5 + $0x120] sm:$0xf]
    %v116 = vld [vmem:[#allocation5 + $0x124] sm:$0xf]
    %v117 = vld [vmem:[#allocation5 + $0x128] sm:$0xf]
    %v118 = vld [vmem:[#allocation5 + $0x12c] sm:$0xf]
    %v119 = vld [vmem:[#allocation5 + $0x130] sm:$0xf]
    %v120 = vld [vmem:[#allocation5 + $0x134] sm:$0xf]
    %v121 = vld [vmem:[#allocation5 + $0x138] sm:$0xf]
    %v122 = vld [vmem:[#allocation5 + $0x13c] sm:$0xf]
    %v123 = vld [vmem:[#allocation5 + $0x140] sm:$0xf]
    %v124 = vld [vmem:[#allocation5 + $0x144] sm:$0xf]
    %v125 = vld [vmem:[#allocation5 + $0x148] sm:$0xf]
    %v126 = vld [vmem:[#allocation5 + $0x14c] sm:$0xf]
    %v127 = vld [vmem:[#allocation5 + $0x150] sm:$0xf]
    %v128 = vld [vmem:[#allocation5 + $0x154] sm:$0xf]
    %v129 = vld [vmem:[#allocation5 + $0x158] sm:$0xf]
    %v130 = vld [vmem:[#allocation5 + $0x15c] sm:$0xf]
    %v131 = vld [vmem:[#allocation5 + $0x160] sm:$0xf]
    %v132 = vld [vmem:[#allocation5 + $0x164] sm:$0xf]
    %v133 = vld [vmem:[#allocation5 + $0x168] sm:$0xf]
    %v134 = vld [vmem:[#allocation5 + $0x16c] sm:$0xf]
    %v135 = vld [vmem:[#allocation5 + $0x170] sm:$0xf]
    %v136 = vld [vmem:[#allocation5 + $0x174] sm:$0xf]
    %v137 = vld [vmem:[#allocation5 + $0x178] sm:$0xf]
    %v138 = vld [vmem:[#allocation5 + $0x17c] sm:$0xf]
    %v139 = vld [vmem:[#allocation5 + $0x180] sm:$0xf]
    %v140 = vld [vmem:[#allocation5 + $0x184] sm:$0xf]
    %v141 = vld [vmem:[%s2] sm:$0x1]
    %v143 = vlaneseq
    %v144 = vshrl.u32 %v143, 7
    %v145 = vsub.s32 0, %v144
    %v146 = vrot.slane %v141, %v145
    %v149 = vcombine.high %v42, %v42
    %v151 = vunpack.c.l.s4 1966171168
    %v152 = vunpack.c.0.s8 %v151
    %v153 = vlaneseq
    %v154 = vshrl.u32 %v153, 7
    %v155 = vsub.s32 %v152, %v154
    %v156 = vrot.slane %v42, %v155
    %v158 = vunpack.c.l.s4 1966171168
    %v159 = vunpack.c.0.s8 %v158
    %v160 = vlaneseq
    %v161 = vshrl.u32 %v160, 7
    %v162 = vsub.s32 %v159, %v161
    %v163 = vrot.slane %v149, %v162
    %v164 = vcombine.high %v156, %v156
    %v165 = vcombine.high %v163, %v163
    %v167 = vunpack.c.l.s4 1966171168
    %v168 = vunpack.c.0.s8 %v167
    %v169 = vlaneseq
    %v170 = vshrl.u32 %v169, 7
    %v171 = vsub.s32 %v168, %v170
    %v172 = vrot.slane %v156, %v171
    %v174 = vunpack.c.l.s4 1966171168
    %v175 = vunpack.c.0.s8 %v174
    %v176 = vlaneseq
    %v177 = vshrl.u32 %v176, 7
    %v178 = vsub.s32 %v175, %v177
    %v179 = vrot.slane %v163, %v178
    %v181 = vunpack.c.l.s4 1966171168
    %v182 = vunpack.c.0.s8 %v181
    %v183 = vlaneseq
    %v184 = vshrl.u32 %v183, 7
    %v185 = vsub.s32 %v182, %v184
    %v186 = vrot.slane %v164, %v185
    %v188 = vunpack.c.l.s4 1966171168
    %v189 = vunpack.c.0.s8 %v188
    %v190 = vlaneseq
    %v191 = vshrl.u32 %v190, 7
    %v192 = vsub.s32 %v189, %v191
    %v193 = vrot.slane %v165, %v192
    %v194 = vcombine.high %v172, %v172
    %v195 = vcombine.high %v179, %v179
    %v196 = vcombine.high %v186, %v186
    %v301 = vunpack.c.l.b16 %v43
    %v302 = vunpack.c.l.b16 %v44
    %v303 = vunpack.c.l.b16 %v45
    %v304 = vunpack.c.l.b16 %v46
    %v305 = vunpack.c.l.b16 %v47
    %v306 = vunpack.c.l.b16 %v48
    %v307 = vunpack.c.l.b16 %v49
    %v308 = vunpack.c.l.b16 %v50
    %v309 = vunpack.c.l.b16 %v51
    %v310 = vunpack.c.l.b16 %v52
    %v311 = vunpack.c.l.b16 %v53
    %v312 = vunpack.c.l.b16 %v54
    %v313 = vunpack.c.l.b16 %v55
    %v314 = vunpack.c.l.b16 %v56
    %v315 = vunpack.c.l.b16 %v57
    %v316 = vunpack.c.l.b16 %v58
    %v317 = vunpack.c.l.b16 %v59
    %v318 = vunpack.c.l.b16 %v60
    %v319 = vunpack.c.l.b16 %v61
    %v320 = vunpack.c.l.b16 %v62
    %v321 = vunpack.c.l.b16 %v63
    %v322 = vunpack.c.l.b16 %v64
    %v323 = vunpack.c.l.b16 %v65
    %v324 = vunpack.c.l.b16 %v66
    %v325 = vunpack.c.l.b16 %v67
    %v326 = vunpack.c.l.b16 %v68
    %v327 = vunpack.c.l.b16 %v69
    %v328 = vunpack.c.l.b16 %v70
    %v329 = vunpack.c.l.b16 %v71
    %v330 = vunpack.c.l.b16 %v72
    %v331 = vunpack.c.l.b16 %v73
    %v332 = vunpack.c.l.b16 %v74
    %v333 = vunpack.c.l.b16 %v75
    %v334 = vunpack.c.l.b16 %v76
    %v335 = vunpack.c.l.b16 %v77
    %v336 = vunpack.c.l.b16 %v78
    %v337 = vunpack.c.l.b16 %v79
    %v338 = vunpack.c.l.b16 %v80
    %v339 = vunpack.c.l.b16 %v81
    %v340 = vunpack.c.l.b16 %v82
    %v341 = vunpack.c.l.b16 %v83
    %v342 = vunpack.c.l.b16 %v84
    %v343 = vunpack.c.l.b16 %v85
    %v344 = vunpack.c.l.b16 %v86
    %v345 = vunpack.c.l.b16 %v87
    %v346 = vunpack.c.l.b16 %v88
    %v347 = vunpack.c.l.b16 %v89
    %v348 = vunpack.c.l.b16 %v90
    %v349 = vunpack.c.l.b16 %v91
    %v350 = vunpack.c.l.b16 %v92
    %v351 = vunpack.c.l.b16 %v93
    %v352 = vunpack.c.l.b16 %v94
    %v353 = vunpack.c.l.b16 %v95
    %v354 = vunpack.c.l.b16 %v96
    %v355 = vunpack.c.l.b16 %v97
    %v356 = vunpack.c.l.b16 %v98
    %v357 = vunpack.c.l.b16 %v99
    %v358 = vunpack.c.l.b16 %v100
    %v359 = vunpack.c.l.b16 %v101
    %v360 = vunpack.c.l.b16 %v102
    %v361 = vunpack.c.l.b16 %v103
    %v362 = vunpack.c.l.b16 %v104
    %v363 = vunpack.c.l.b16 %v105
    %v364 = vunpack.c.l.b16 %v106
    %v365 = vunpack.c.l.b16 %v107
    %v366 = vunpack.c.l.b16 %v108
    %v367 = vunpack.c.l.b16 %v109
    %v368 = vunpack.c.l.b16 %v110
    %v369 = vunpack.c.l.b16 %v111
    %v370 = vunpack.c.l.b16 %v112
    %v371 = vunpack.c.l.b16 %v113
    %v372 = vunpack.c.l.b16 %v114
    %v373 = vunpack.c.l.b16 %v115
    %v374 = vunpack.c.l.b16 %v116
    %v375 = vunpack.c.l.b16 %v117
    %v376 = vunpack.c.l.b16 %v118
    %v377 = vunpack.c.l.b16 %v119
    %v378 = vunpack.c.l.b16 %v120
    %v379 = vunpack.c.l.b16 %v121
    %v380 = vunpack.c.l.b16 %v122
    %v381 = vunpack.c.l.b16 %v123
    %v382 = vunpack.c.l.b16 %v124
    %v383 = vunpack.c.l.b16 %v125
    %v384 = vunpack.c.l.b16 %v126
    %v385 = vunpack.c.l.b16 %v127
    %v386 = vunpack.c.l.b16 %v128
    %v387 = vunpack.c.l.b16 %v129
    %v388 = vunpack.c.l.b16 %v130
    %v389 = vunpack.c.l.b16 %v131
    %v390 = vunpack.c.l.b16 %v132
    %v391 = vunpack.c.l.b16 %v133
    %v392 = vunpack.c.l.b16 %v134
    %v393 = vunpack.c.l.b16 %v135
    %v394 = vunpack.c.l.b16 %v136
    %v395 = vunpack.c.l.b16 %v137
    %v396 = vunpack.c.l.b16 %v138
    %v397 = vunpack.c.l.b16 %v139
    %v398 = vunpack.c.l.b16 %v140
    %v399 = vpack.c.b16 %v302, %v301
    %v400 = vpack.c.b16 %v304, %v303
    %v401 = vpack.c.b16 %v306, %v305
    %v402 = vpack.c.b16 %v308, %v307
    %v403 = vpack.c.b16 %v310, %v309
    %v404 = vpack.c.b16 %v312, %v311
    %v405 = vpack.c.b16 %v314, %v313
    %v406 = vpack.c.b16 %v316, %v315
    %v407 = vpack.c.b16 %v318, %v317
    %v408 = vpack.c.b16 %v320, %v319
    %v409 = vpack.c.b16 %v322, %v321
    %v410 = vpack.c.b16 %v324, %v323
    %v411 = vpack.c.b16 %v326, %v325
    %v412 = vpack.c.b16 %v328, %v327
    %v413 = vpack.c.b16 %v330, %v329
    %v414 = vpack.c.b16 %v332, %v331
    %v415 = vpack.c.b16 %v334, %v333
    %v416 = vpack.c.b16 %v336, %v335
    %v417 = vpack.c.b16 %v338, %v337
    %v418 = vpack.c.b16 %v340, %v339
    %v419 = vpack.c.b16 %v342, %v341
    %v420 = vpack.c.b16 %v344, %v343
    %v421 = vpack.c.b16 %v346, %v345
    %v422 = vpack.c.b16 %v348, %v347
    %v423 = vpack.c.b16 %v350, %v349
    %v424 = vpack.c.b16 %v352, %v351
    %v425 = vpack.c.b16 %v354, %v353
    %v426 = vpack.c.b16 %v356, %v355
    %v427 = vpack.c.b16 %v358, %v357
    %v428 = vpack.c.b16 %v360, %v359
    %v429 = vpack.c.b16 %v362, %v361
    %v430 = vpack.c.b16 %v364, %v363
    %v431 = vpack.c.b16 %v366, %v365
    %v432 = vpack.c.b16 %v368, %v367
    %v433 = vpack.c.b16 %v370, %v369
    %v434 = vpack.c.b16 %v372, %v371
    %v435 = vpack.c.b16 %v374, %v373
    %v436 = vpack.c.b16 %v376, %v375
    %v437 = vpack.c.b16 %v378, %v377
    %v438 = vpack.c.b16 %v380, %v379
    %v439 = vpack.c.b16 %v382, %v381
    %v440 = vpack.c.b16 %v384, %v383
    %v441 = vpack.c.b16 %v386, %v385
    %v442 = vpack.c.b16 %v388, %v387
    %v443 = vpack.c.b16 %v390, %v389
    %v444 = vpack.c.b16 %v392, %v391
    %v445 = vpack.c.b16 %v394, %v393
    %v446 = vpack.c.b16 %v396, %v395
    %v447 = vpack.c.b16 %v398, %v397
    %vm497 = vcmask 130048
    %v499 = vsel %vm497, %v195, 0
    %501 = vmatprep.subr.bf16.mxu0 0
    %502 = vmatpush1.bf16.msra.mxu0 %v406
    %503 = vmatprep.subr.bf16.mxu0 0
    %504 = vmatpush1.bf16.msra.mxu0 %v405
    %505 = vmatprep.subr.bf16.mxu0 0
    %506 = vmatpush1.bf16.msra.mxu0 %v404
    %507 = vmatprep.subr.bf16.mxu0 0
    %508 = vmatpush1.bf16.msra.mxu0 %v403
    %509 = vmatprep.subr.bf16.mxu0 0
    %510 = vmatpush1.bf16.msra.mxu0 %v402
    %511 = vmatprep.subr.bf16.mxu0 0
    %512 = vmatpush1.bf16.msra.mxu0 %v401
    %513 = vmatprep.subr.bf16.mxu0 0
    %514 = vmatpush1.bf16.msra.mxu0 %v400
    %515 = vmatprep.subr.bf16.mxu0 0
    %516 = vmatpush1.bf16.msra.mxu0 %v399
    %517 = vmatprep.subr.bf16.mxu0 0
    %518 = vmatpush2.bf16.msra.mxu0 %v414
    %519 = vmatprep.subr.bf16.mxu0 0
    %520 = vmatpush2.bf16.msra.mxu0 %v413
    %521 = vmatprep.subr.bf16.mxu0 0
    %522 = vmatpush2.bf16.msra.mxu0 %v412
    %523 = vmatprep.subr.bf16.mxu0 0
    %524 = vmatpush2.bf16.msra.mxu0 %v411
    %525 = vmatprep.subr.bf16.mxu0 0
    %526 = vmatpush2.bf16.msra.mxu0 %v410
    %527 = vmatprep.subr.bf16.mxu0 0
    %528 = vmatpush2.bf16.msra.mxu0 %v409
    %529 = vmatprep.subr.bf16.mxu0 0
    %530 = vmatpush2.bf16.msra.mxu0 %v408
    %531 = vmatprep.subr.bf16.mxu0 0
    %532 = vmatpush2.bf16.msra.mxu0 %v407
    %533 = vmatprep.mubr.bf16.mxu0 %v186
    %534 = vmatmul.mubr.bf16.gmra.mxu0 %v172
    %v535 = vpop.f32.mrf.mxu0
    %v536 = vadd.f32 %v146, %v535
    %v537 = vpop.f32.mrf.mxu0
    %v538 = vpop.f32.mrf.mxu0
    %v539 = vpop.f32.mrf.mxu0
    %540 = vdwg.mxu0
    %541 = vmatprep.subr.bf16.mxu0 0
    %542 = vmatpush1.bf16.msra.mxu0 %v422
    %543 = vmatprep.subr.bf16.mxu0 0
    %544 = vmatpush1.bf16.msra.mxu0 %v421
    %545 = vmatprep.subr.bf16.mxu0 0
    %546 = vmatpush1.bf16.msra.mxu0 %v420
    %547 = vmatprep.subr.bf16.mxu0 0
    %548 = vmatpush1.bf16.msra.mxu0 %v419
    %549 = vmatprep.subr.bf16.mxu0 0
    %550 = vmatpush1.bf16.msra.mxu0 %v418
    %551 = vmatprep.subr.bf16.mxu0 0
    %552 = vmatpush1.bf16.msra.mxu0 %v417
    %553 = vmatprep.subr.bf16.mxu0 0
    %554 = vmatpush1.bf16.msra.mxu0 %v416
    %555 = vmatprep.subr.bf16.mxu0 0
    %556 = vmatpush1.bf16.msra.mxu0 %v415
    %557 = vmatprep.subr.bf16.mxu0 0
    %558 = vmatpush2.bf16.msra.mxu0 %v430
    %559 = vmatprep.subr.bf16.mxu0 0
    %560 = vmatpush2.bf16.msra.mxu0 %v429
    %561 = vmatprep.subr.bf16.mxu0 0
    %562 = vmatpush2.bf16.msra.mxu0 %v428
    %563 = vmatprep.subr.bf16.mxu0 0
    %564 = vmatpush2.bf16.msra.mxu0 %v427
    %565 = vmatprep.subr.bf16.mxu0 0
    %566 = vmatpush2.bf16.msra.mxu0 %v426
    %567 = vmatprep.subr.bf16.mxu0 0
    %568 = vmatpush2.bf16.msra.mxu0 %v425
    %569 = vmatprep.subr.bf16.mxu0 0
    %570 = vmatpush2.bf16.msra.mxu0 %v424
    %571 = vmatprep.subr.bf16.mxu0 0
    %572 = vmatpush2.bf16.msra.mxu0 %v423
    %573 = vmatprep.mubr.bf16.mxu0 %v196
    %574 = vmatmul.mubr.bf16.gmra.mxu0 %v194
    %v575 = vpop.f32.mrf.mxu0
    %v576 = vadd.f32 %v536, %v575
    %v577 = vpop.f32.mrf.mxu0
    %v578 = vpop.f32.mrf.mxu0
    %v579 = vpop.f32.mrf.mxu0
    %580 = vdwg.mxu0
    %581 = vmatprep.subr.bf16.mxu0 0
    %582 = vmatpush1.bf16.msra.mxu0 %v438
    %583 = vmatprep.subr.bf16.mxu0 0
    %584 = vmatpush1.bf16.msra.mxu0 %v437
    %585 = vmatprep.subr.bf16.mxu0 0
    %586 = vmatpush1.bf16.msra.mxu0 %v436
    %587 = vmatprep.subr.bf16.mxu0 0
    %588 = vmatpush1.bf16.msra.mxu0 %v435
    %589 = vmatprep.subr.bf16.mxu0 0
    %590 = vmatpush1.bf16.msra.mxu0 %v434
    %591 = vmatprep.subr.bf16.mxu0 0
    %592 = vmatpush1.bf16.msra.mxu0 %v433
    %593 = vmatprep.subr.bf16.mxu0 0
    %594 = vmatpush1.bf16.msra.mxu0 %v432
    %595 = vmatprep.subr.bf16.mxu0 0
    %596 = vmatpush1.bf16.msra.mxu0 %v431
    %597 = vmatprep.subr.bf16.mxu0 0
    %598 = vmatpush2.bf16.msra.mxu0 %v446
    %599 = vmatprep.subr.bf16.mxu0 0
    %600 = vmatpush2.bf16.msra.mxu0 %v445
    %601 = vmatprep.subr.bf16.mxu0 0
    %602 = vmatpush2.bf16.msra.mxu0 %v444
    %603 = vmatprep.subr.bf16.mxu0 0
    %604 = vmatpush2.bf16.msra.mxu0 %v443
    %605 = vmatprep.subr.bf16.mxu0 0
    %606 = vmatpush2.bf16.msra.mxu0 %v442
    %607 = vmatprep.subr.bf16.mxu0 0
    %608 = vmatpush2.bf16.msra.mxu0 %v441
    %609 = vmatprep.subr.bf16.mxu0 0
    %610 = vmatpush2.bf16.msra.mxu0 %v440
    %611 = vmatprep.subr.bf16.mxu0 0
    %612 = vmatpush2.bf16.msra.mxu0 %v439
    %613 = vmatprep.mubr.bf16.mxu0 %v193
    %614 = vmatmul.mubr.bf16.gmra.mxu0 %v179
    %v615 = vpop.f32.mrf.mxu0
    %v616 = vadd.f32 %v576, %v615
    %v617 = vpop.f32.mrf.mxu0
    %v618 = vpop.f32.mrf.mxu0
    %v619 = vpop.f32.mrf.mxu0
    %620 = vdwg.mxu0
    %621 = vmatprep.subr.bf16.mxu0 0
    %622 = vmatpush1.bf16.msra.mxu0 0
    %623 = vmatprep.subr.bf16.mxu0 0
    %624 = vmatpush1.bf16.msra.mxu0 0
    %625 = vmatprep.subr.bf16.mxu0 0
    %626 = vmatpush1.bf16.msra.mxu0 0
    %627 = vmatprep.subr.bf16.mxu0 0
    %628 = vmatpush1.bf16.msra.mxu0 0
    %629 = vmatprep.subr.bf16.mxu0 0
    %630 = vmatpush1.bf16.msra.mxu0 0
    %631 = vmatprep.subr.bf16.mxu0 0
    %632 = vmatpush1.bf16.msra.mxu0 0
    %633 = vmatprep.subr.bf16.mxu0 0
    %634 = vmatpush1.bf16.msra.mxu0 0
    %635 = vmatprep.subr.bf16.mxu0 0
    %636 = vmatpush1.bf16.msra.mxu0 %v447
    %637 = vmatprep.subr.bf16.mxu0 0
    %638 = vmatpush2.bf16.msra.mxu0 0
    %639 = vmatprep.subr.bf16.mxu0 0
    %640 = vmatpush2.bf16.msra.mxu0 0
    %641 = vmatprep.subr.bf16.mxu0 0
    %642 = vmatpush2.bf16.msra.mxu0 0
    %643 = vmatprep.subr.bf16.mxu0 0
    %644 = vmatpush2.bf16.msra.mxu0 0
    %645 = vmatprep.subr.bf16.mxu0 0
    %646 = vmatpush2.bf16.msra.mxu0 0
    %647 = vmatprep.subr.bf16.mxu0 0
    %648 = vmatpush2.bf16.msra.mxu0 0
    %649 = vmatprep.subr.bf16.mxu0 0
    %650 = vmatpush2.bf16.msra.mxu0 0
    %651 = vmatprep.subr.bf16.mxu0 0
    %652 = vmatpush2.bf16.msra.mxu0 0
    %653 = vmatprep.mubr.bf16.mxu0 0
    %654 = vmatmul.mubr.bf16.gmra.mxu0 %v499
    %v655 = vpop.f32.mrf.mxu0
    %v656 = vadd.f32 %v616, %v655
    %v657 = vpop.f32.mrf.mxu0
    %v658 = vpop.f32.mrf.mxu0
    %v659 = vpop.f32.mrf.mxu0
    %660 = vdwg.mxu0
    %661 = vst [vmem:[#allocation7] sm:$0x3] %v656
    // Predicated region
    $region22: #{tpu_custom_call.1} parent=1 // pred_check
      _
    $region23: #{tpu_custom_call.1} parent=1 // pred_check_branch
      %663 = sbr.rel (0) target = $region25
    $region24: #{tpu_custom_call.1} parent=1 // pred_region
      %s665 = ssub.s32 32, 32
      %666 = vsyncadd [#allocation4], %s665
      %s668 = sshll.u32 [#allocation7], 4
      %s669 = int_to_ptr.vmem [resolvable:$true] %s668
      %671 = dma.vmem_to_hbm [thread:$0]  %s669, 32, %s3, [#allocation4]
    $region25: #{tpu_custom_call.1} parent=1 // pred_fallthru
      _
    // Predicated region
    $region26: #{tpu_custom_call.1} parent=1 // pred_check
      _
    $region27: #{tpu_custom_call.1} parent=1 // pred_check_branch
      %673 = sbr.rel (0) target = $region29
    $region28: #{tpu_custom_call.1} parent=1 // pred_region
      %674 = dma.done [#allocation4], 32
    $region29: #{tpu_custom_call.1} parent=1 // pred_fallthru
      _
    %675 = vsyncpa [#allocation3], 1
    %676 = vsyncpa [#allocation6], 1
    %677 = vsyncpa [#allocation4], 1

</llo_original>
